<compile_context>
chip_gen: v7x
topology: tpu7x:2x2x1
jax: 0.10.0
libtpu: 0.0.40
codegen_flags: <defaults>
</compile_context>

<pallas_src>
import jax
import jax.numpy as jnp
from jax.experimental import pallas as pl
from jax.experimental.pallas import tpu as pltpu

LANE = 128
_VMEM_LIMIT_BYTES = 48 * 1024 * 1024    # explicit scoped-VMEM cap (headroom under v7x 64 MiB/TC)
_VMEM_BLOCK_BUDGET = 36 * 1024 * 1024   # target for double-buffered blocks + f32 working set


def _dwconv_kernel(x_ref, w_ref, b_ref, o_ref):
    """One (batch, channel-tile) step of the depthwise 3x3 conv.

    x_ref: (1, H+2, W+2, TC)  zero-padded input block (model dtype, channels-last)
    w_ref: (9, TC)            per-channel taps, row k corresponds to (dh, dw) = (k//3, k%3)
    b_ref: (1, TC)            bias
    o_ref: (1, H, W, TC)      output block
    """
    H = o_ref.shape[1]
    W = o_ref.shape[2]
    TC = o_ref.shape[3]

    # f32 accumulator initialized with the broadcast bias -> drops a full-block add pass.
    acc = jnp.broadcast_to(b_ref[...].astype(jnp.float32), (H, W, TC))

    # Hoist the 9 per-tap weight rows once (loop below is Python-unrolled).
    w = [w_ref[k, :].astype(jnp.float32) for k in range(9)]

    # 9-tap depthwise cross-correlation (PyTorch conv2d semantics: no kernel flip).
    # Taps are sliced straight from the padded ref and cast per-tap, so the DMA'd block
    # stays in the model dtype while accumulation is f32 (required on v5e, fine elsewhere).
    for dh in range(3):
        for dw in range(3):
            tap = x_ref[0, dh:dh + H, dw:dw + W, :].astype(jnp.float32)
            acc = acc + tap * w[3 * dh + dw]

    o_ref[0] = acc.astype(o_ref.dtype)


def _block_vmem_bytes(H, W, tc, itemsize):
    in_blk = (H + 2) * (W + 2) * tc * itemsize
    out_blk = H * W * tc * itemsize
    work = H * W * tc * 4                      # f32 accumulator working set
    return 2 * (in_blk + out_blk) + work       # 2x = double-buffered pipeline


def _pick_channel_tile(Cp, H, W, itemsize):
    for tc in (512, 256, 128):
        if Cp % tc == 0 and _block_vmem_bytes(H, W, tc, itemsize) <= _VMEM_BLOCK_BUDGET:
            return tc
    # TODO(synk): for very large H*W stages also tile H into row strips (needs a manual
    # 2-row-halo DMA via memory_space=pl.ANY + pltpu.make_async_copy).
    return 128


def dwconv_pallas(x, weight_oihw, bias, H, W):
    """Depthwise 3x3 conv (padding=1, groups=C) with bias.

    x: (B, N, C) with N == H * W; weight_oihw: (C, 1, 3, 3); bias: (C,). Returns (B, N, C).
    """
    B, N, C = x.shape
    assert N == H * W

    # ---- JAX-side glue: channels-last, zero spatial halo pad, lane-dense channel pad ----
    Cp = ((C + LANE - 1) // LANE) * LANE                                  # multiple of 128
    x_nhwc = x.reshape(B, H, W, C)
    x_pad = jnp.pad(x_nhwc, ((0, 0), (1, 1), (1, 1), (0, Cp - C)))        # (B, H+2, W+2, Cp)

    w9 = jnp.transpose(weight_oihw[:, 0].reshape(C, 9), (1, 0))           # (9, C), k = 3*dh+dw
    w9 = jnp.pad(w9, ((0, 0), (0, Cp - C)))                               # (9, Cp)
    b2 = jnp.pad(bias, (0, Cp - C)).reshape(1, Cp)                        # (1, Cp)

    TC = _pick_channel_tile(Cp, H, W, x.dtype.itemsize)
    n_ct = Cp // TC

    out_nhwc = pl.pallas_call(
        _dwconv_kernel,
        out_shape=jax.ShapeDtypeStruct((B, H, W, Cp), x.dtype),
        grid=(B, n_ct),
        in_specs=[
            pl.BlockSpec((1, H + 2, W + 2, TC), lambda b, c: (b, 0, 0, c)),
            pl.BlockSpec((9, TC), lambda b, c: (0, c)),
            pl.BlockSpec((1, TC), lambda b, c: (0, c)),
        ],
        out_specs=pl.BlockSpec((1, H, W, TC), lambda b, c: (b, 0, 0, c)),
        compiler_params=pltpu.CompilerParams(
            dimension_semantics=("parallel", "parallel"),
            vmem_limit_bytes=_VMEM_LIMIT_BYTES,
        ),
    )(x_pad, w9, b2)

    return out_nhwc[..., :C].reshape(B, N, C)


def dwconv_reference(x, weight_oihw, bias, H, W):
    """Pure-JAX reference matching the PyTorch module exactly (NCHW depthwise conv)."""
    B, N, C = x.shape
    x_nchw = jnp.transpose(x, (0, 2, 1)).reshape(B, C, H, W)
    y = jax.lax.conv_general_dilated(
        x_nchw, weight_oihw,
        window_strides=(1, 1), padding=((1, 1), (1, 1)),
        dimension_numbers=("NCHW", "OIHW", "NCHW"),
        feature_group_count=C,
    ) + bias.reshape(1, C, 1, 1)
    return jnp.transpose(y.reshape(B, C, N), (0, 2, 1))


if __name__ == "__main__":
    # Small shapes consistent with the module's forward: x (B, N, C), N = H * W
    B, C, H, W = 2, 32, 16, 16
    N = H * W

    key = jax.random.PRNGKey(0)
    kx, kw, kb = jax.random.split(key, 3)
    x = jax.random.normal(kx, (B, N, C), dtype=jnp.float32)
    # nn.Conv2d(dim, dim, 3, 1, 1, bias=True, groups=dim) -> weight (C, 1, 3, 3), bias (C,)
    weight = jax.random.normal(kw, (C, 1, 3, 3), dtype=jnp.float32) * 0.1
    bias = jax.random.normal(kb, (C,), dtype=jnp.float32) * 0.1

    out = dwconv_pallas(x, weight, bias, H, W)
    out = jax.block_until_ready(out)

    ref = dwconv_reference(x, weight, bias, H, W)
    assert out.shape == (B, N, C)
    assert jnp.allclose(out, ref, atol=1e-5, rtol=1e-5), "mismatch vs reference conv"

    print("KERNEL_OK")
</pallas_src>

<mosaic_0001>
module attributes {stable_mosaic.version = 11 : i64} {
  func.func @_dwconv_kernel(%arg0: i32, %arg1: i32, %arg2: memref<1x18x18x128xf32, #tpu.memory_space<vmem>>, %arg3: memref<9x128xf32, #tpu.memory_space<vmem>>, %arg4: memref<1x128xf32, #tpu.memory_space<vmem>>, %arg5: memref<1x16x16x128xf32, #tpu.memory_space<vmem>>) attributes {dimension_semantics = [#tpu.dimension_semantics<parallel>, #tpu.dimension_semantics<parallel>], iteration_bounds = array<i64: 2, 1>, scalar_prefetch = 0 : i64, scratch_operands = 0 : i64, tpu.core_type = #tpu.core_type<tc>, window_params = [{transform_indices = @transform_0, window_bounds = array<i64: 1, 18, 18, 128>}, {transform_indices = @transform_1, window_bounds = array<i64: 9, 128>}, {transform_indices = @transform_2, window_bounds = array<i64: 1, 128>}, {transform_indices = @transform_3, window_bounds = array<i64: 1, 16, 16, 128>}]} {
    %c0 = arith.constant 0 : index
    %c0_0 = arith.constant 0 : index
    %0 = vector.load %arg4[%c0, %c0_0] : memref<1x128xf32, #tpu.memory_space<vmem>>, vector<1x128xf32>
    %1 = vector.shape_cast %0 : vector<1x128xf32> to vector<1x1x128xf32>
    %2 = vector.broadcast %1 : vector<1x1x128xf32> to vector<16x16x128xf32>
    %c0_1 = arith.constant 0 : index
    %c0_2 = arith.constant 0 : index
    %3 = vector.load %arg3[%c0_1, %c0_2] : memref<9x128xf32, #tpu.memory_space<vmem>>, vector<1x128xf32>
    %4 = vector.shape_cast %3 : vector<1x128xf32> to vector<128xf32>
    %c1 = arith.constant 1 : index
    %c0_3 = arith.constant 0 : index
    %5 = vector.load %arg3[%c1, %c0_3] : memref<9x128xf32, #tpu.memory_space<vmem>>, vector<1x128xf32>
    %6 = vector.shape_cast %5 : vector<1x128xf32> to vector<128xf32>
    %c2 = arith.constant 2 : index
    %c0_4 = arith.constant 0 : index
    %7 = vector.load %arg3[%c2, %c0_4] : memref<9x128xf32, #tpu.memory_space<vmem>>, vector<1x128xf32>
    %8 = vector.shape_cast %7 : vector<1x128xf32> to vector<128xf32>
    %c3 = arith.constant 3 : index
    %c0_5 = arith.constant 0 : index
    %9 = vector.load %arg3[%c3, %c0_5] : memref<9x128xf32, #tpu.memory_space<vmem>>, vector<1x128xf32>
    %10 = vector.shape_cast %9 : vector<1x128xf32> to vector<128xf32>
    %c4 = arith.constant 4 : index
    %c0_6 = arith.constant 0 : index
    %11 = vector.load %arg3[%c4, %c0_6] : memref<9x128xf32, #tpu.memory_space<vmem>>, vector<1x128xf32>
    %12 = vector.shape_cast %11 : vector<1x128xf32> to vector<128xf32>
    %c5 = arith.constant 5 : index
    %c0_7 = arith.constant 0 : index
    %13 = vector.load %arg3[%c5, %c0_7] : memref<9x128xf32, #tpu.memory_space<vmem>>, vector<1x128xf32>
    %14 = vector.shape_cast %13 : vector<1x128xf32> to vector<128xf32>
    %c6 = arith.constant 6 : index
    %c0_8 = arith.constant 0 : index
    %15 = vector.load %arg3[%c6, %c0_8] : memref<9x128xf32, #tpu.memory_space<vmem>>, vector<1x128xf32>
    %16 = vector.shape_cast %15 : vector<1x128xf32> to vector<128xf32>
    %c7 = arith.constant 7 : index
    %c0_9 = arith.constant 0 : index
    %17 = vector.load %arg3[%c7, %c0_9] : memref<9x128xf32, #tpu.memory_space<vmem>>, vector<1x128xf32>
    %18 = vector.shape_cast %17 : vector<1x128xf32> to vector<128xf32>
    %c8 = arith.constant 8 : index
    %c0_10 = arith.constant 0 : index
    %19 = vector.load %arg3[%c8, %c0_10] : memref<9x128xf32, #tpu.memory_space<vmem>>, vector<1x128xf32>
    %20 = vector.shape_cast %19 : vector<1x128xf32> to vector<128xf32>
    %c0_11 = arith.constant 0 : index
    %c0_12 = arith.constant 0 : index
    %c0_13 = arith.constant 0 : index
    %c0_14 = arith.constant 0 : index
    %21 = vector.load %arg2[%c0_11, %c0_12, %c0_13, %c0_14] : memref<1x18x18x128xf32, #tpu.memory_space<vmem>>, vector<1x16x16x128xf32>
    %22 = vector.shape_cast %21 : vector<1x16x16x128xf32> to vector<16x16x128xf32>
    %23 = vector.shape_cast %4 : vector<128xf32> to vector<1x1x128xf32>
    %24 = vector.broadcast %23 : vector<1x1x128xf32> to vector<16x16x128xf32>
    %25 = arith.mulf %22, %24 : vector<16x16x128xf32>
    %26 = arith.addf %2, %25 : vector<16x16x128xf32>
    %c0_15 = arith.constant 0 : index
    %c0_16 = arith.constant 0 : index
    %c1_17 = arith.constant 1 : index
    %c0_18 = arith.constant 0 : index
    %27 = vector.load %arg2[%c0_15, %c0_16, %c1_17, %c0_18] : memref<1x18x18x128xf32, #tpu.memory_space<vmem>>, vector<1x16x16x128xf32>
    %28 = vector.shape_cast %27 : vector<1x16x16x128xf32> to vector<16x16x128xf32>
    %29 = vector.shape_cast %6 : vector<128xf32> to vector<1x1x128xf32>
    %30 = vector.broadcast %29 : vector<1x1x128xf32> to vector<16x16x128xf32>
    %31 = arith.mulf %28, %30 : vector<16x16x128xf32>
    %32 = arith.addf %26, %31 : vector<16x16x128xf32>
    %c0_19 = arith.constant 0 : index
    %c0_20 = arith.constant 0 : index
    %c2_21 = arith.constant 2 : index
    %c0_22 = arith.constant 0 : index
    %33 = vector.load %arg2[%c0_19, %c0_20, %c2_21, %c0_22] : memref<1x18x18x128xf32, #tpu.memory_space<vmem>>, vector<1x16x16x128xf32>
    %34 = vector.shape_cast %33 : vector<1x16x16x128xf32> to vector<16x16x128xf32>
    %35 = vector.shape_cast %8 : vector<128xf32> to vector<1x1x128xf32>
    %36 = vector.broadcast %35 : vector<1x1x128xf32> to vector<16x16x128xf32>
    %37 = arith.mulf %34, %36 : vector<16x16x128xf32>
    %38 = arith.addf %32, %37 : vector<16x16x128xf32>
    %c0_23 = arith.constant 0 : index
    %c1_24 = arith.constant 1 : index
    %c0_25 = arith.constant 0 : index
    %c0_26 = arith.constant 0 : index
    %39 = vector.load %arg2[%c0_23, %c1_24, %c0_25, %c0_26] : memref<1x18x18x128xf32, #tpu.memory_space<vmem>>, vector<1x16x16x128xf32>
    %40 = vector.shape_cast %39 : vector<1x16x16x128xf32> to vector<16x16x128xf32>
    %41 = vector.shape_cast %10 : vector<128xf32> to vector<1x1x128xf32>
    %42 = vector.broadcast %41 : vector<1x1x128xf32> to vector<16x16x128xf32>
    %43 = arith.mulf %40, %42 : vector<16x16x128xf32>
    %44 = arith.addf %38, %43 : vector<16x16x128xf32>
    %c0_27 = arith.constant 0 : index
    %c1_28 = arith.constant 1 : index
    %c1_29 = arith.constant 1 : index
    %c0_30 = arith.constant 0 : index
    %45 = vector.load %arg2[%c0_27, %c1_28, %c1_29, %c0_30] : memref<1x18x18x128xf32, #tpu.memory_space<vmem>>, vector<1x16x16x128xf32>
    %46 = vector.shape_cast %45 : vector<1x16x16x128xf32> to vector<16x16x128xf32>
    %47 = vector.shape_cast %12 : vector<128xf32> to vector<1x1x128xf32>
    %48 = vector.broadcast %47 : vector<1x1x128xf32> to vector<16x16x128xf32>
    %49 = arith.mulf %46, %48 : vector<16x16x128xf32>
    %50 = arith.addf %44, %49 : vector<16x16x128xf32>
    %c0_31 = arith.constant 0 : index
    %c1_32 = arith.constant 1 : index
    %c2_33 = arith.constant 2 : index
    %c0_34 = arith.constant 0 : index
    %51 = vector.load %arg2[%c0_31, %c1_32, %c2_33, %c0_34] : memref<1x18x18x128xf32, #tpu.memory_space<vmem>>, vector<1x16x16x128xf32>
    %52 = vector.shape_cast %51 : vector<1x16x16x128xf32> to vector<16x16x128xf32>
    %53 = vector.shape_cast %14 : vector<128xf32> to vector<1x1x128xf32>
    %54 = vector.broadcast %53 : vector<1x1x128xf32> to vector<16x16x128xf32>
    %55 = arith.mulf %52, %54 : vector<16x16x128xf32>
    %56 = arith.addf %50, %55 : vector<16x16x128xf32>
    %c0_35 = arith.constant 0 : index
    %c2_36 = arith.constant 2 : index
    %c0_37 = arith.constant 0 : index
    %c0_38 = arith.constant 0 : index
    %57 = vector.load %arg2[%c0_35, %c2_36, %c0_37, %c0_38] : memref<1x18x18x128xf32, #tpu.memory_space<vmem>>, vector<1x16x16x128xf32>
    %58 = vector.shape_cast %57 : vector<1x16x16x128xf32> to vector<16x16x128xf32>
    %59 = vector.shape_cast %16 : vector<128xf32> to vector<1x1x128xf32>
    %60 = vector.broadcast %59 : vector<1x1x128xf32> to vector<16x16x128xf32>
    %61 = arith.mulf %58, %60 : vector<16x16x128xf32>
    %62 = arith.addf %56, %61 : vector<16x16x128xf32>
    %c0_39 = arith.constant 0 : index
    %c2_40 = arith.constant 2 : index
    %c1_41 = arith.constant 1 : index
    %c0_42 = arith.constant 0 : index
    %63 = vector.load %arg2[%c0_39, %c2_40, %c1_41, %c0_42] : memref<1x18x18x128xf32, #tpu.memory_space<vmem>>, vector<1x16x16x128xf32>
    %64 = vector.shape_cast %63 : vector<1x16x16x128xf32> to vector<16x16x128xf32>
    %65 = vector.shape_cast %18 : vector<128xf32> to vector<1x1x128xf32>
    %66 = vector.broadcast %65 : vector<1x1x128xf32> to vector<16x16x128xf32>
    %67 = arith.mulf %64, %66 : vector<16x16x128xf32>
    %68 = arith.addf %62, %67 : vector<16x16x128xf32>
    %c0_43 = arith.constant 0 : index
    %c2_44 = arith.constant 2 : index
    %c2_45 = arith.constant 2 : index
    %c0_46 = arith.constant 0 : index
    %69 = vector.load %arg2[%c0_43, %c2_44, %c2_45, %c0_46] : memref<1x18x18x128xf32, #tpu.memory_space<vmem>>, vector<1x16x16x128xf32>
    %70 = vector.shape_cast %69 : vector<1x16x16x128xf32> to vector<16x16x128xf32>
    %71 = vector.shape_cast %20 : vector<128xf32> to vector<1x1x128xf32>
    %72 = vector.broadcast %71 : vector<1x1x128xf32> to vector<16x16x128xf32>
    %73 = arith.mulf %70, %72 : vector<16x16x128xf32>
    %74 = arith.addf %68, %73 : vector<16x16x128xf32>
    %c0_47 = arith.constant 0 : index
    %c0_48 = arith.constant 0 : index
    %c0_49 = arith.constant 0 : index
    %c0_50 = arith.constant 0 : index
    %75 = vector.load %arg5[%c0_47, %c0_48, %c0_49, %c0_50] : memref<1x16x16x128xf32, #tpu.memory_space<vmem>>, vector<1x16x16x128xf32>
    %76 = vector.shape_cast %75 : vector<1x16x16x128xf32> to vector<16x16x128xf32>
    %77 = vector.shape_cast %74 : vector<16x16x128xf32> to vector<1x16x16x128xf32>
    tpu.vector_store %arg5[%c0_47, %c0_48, %c0_49, %c0_50], %77 {strides = array<i32>} : memref<1x16x16x128xf32, #tpu.memory_space<vmem>>, vector<1x16x16x128xf32>,
    return
  }
  func.func @transform_0(%arg0: i32, %arg1: i32) -> (i32, i32, i32, i32) {
    %c0_i32 = arith.constant 0 : i32
    %c0_i32_0 = arith.constant 0 : i32
    %c0_i32_1 = arith.constant 0 : i32
    return %arg0, %c0_i32, %c0_i32_0, %arg1 : i32, i32, i32, i32
  }
  func.func @transform_1(%arg0: i32, %arg1: i32) -> (i32, i32) {
    %c0_i32 = arith.constant 0 : i32
    %c0_i32_0 = arith.constant 0 : i32
    return %c0_i32, %arg1 : i32, i32
  }
  func.func @transform_2(%arg0: i32, %arg1: i32) -> (i32, i32) {
    %c0_i32 = arith.constant 0 : i32
    %c0_i32_0 = arith.constant 0 : i32
    return %c0_i32, %arg1 : i32, i32
  }
  func.func @transform_3(%arg0: i32, %arg1: i32) -> (i32, i32, i32, i32) {
    %c0_i32 = arith.constant 0 : i32
    %c0_i32_0 = arith.constant 0 : i32
    %c0_i32_1 = arith.constant 0 : i32
    return %arg0, %c0_i32, %c0_i32_0, %arg1 : i32, i32, i32, i32
  }
}

</mosaic_0001>

<llo_original>
// kernel: tpu_custom_call.1
$region0: #{tpu_custom_call.1}
  #allocation0 [shape = 'u32[]', space=smem, size = 0x4, offset = 0x4, fixed_abs, tag = 'smem constant byte address 0x4 - core index']
  #allocation1 [shape = 'u32[144,128]{1,0:T(1,128)}', space=vmem, size = 0x12000, scoped, tag = 'internal scratch']
  %s0 = inlined_call_operand.vmem [shape: f32[2,18,18,128], index: 0, kind: input, shape index: {}]
  %s1 = inlined_call_operand.vmem [shape: f32[9,128], index: 1, kind: input, shape index: {}]
  %s2 = inlined_call_operand.vmem [shape: f32[1,128], index: 2, kind: input, shape index: {}]
  %s3 = inlined_call_operand.hbm [shape: f32[2,16,16,128], index: 3, kind: output, shape index: {}]
  %s4 = sld [smem:[#allocation0]]
  $region45: #{tpu_custom_call.1} parent=0
    _
  %s6 = ssub.s32 1, %s4
  %s7 = scalar_select 0, %s6, %s4
  $region1: #{tpu_custom_call.1} parent=0
    #allocation2 [shape = 'u8[262144]{0}', space=vmem, size = 0x40000, scoped, tag = 'output window, operand 0']
    #allocation3 [shape = 's32[2]{0}', space=sflag, size = 0x8, scoped, tag = 'scoped memory for tpu_custom_call.1']
    %8 = vsyncpa [#allocation3], 0
    %s9 = scalar_lea.sflag [#allocation3], 1
    %10 = vsyncpa %s9, 0
    loop: start=0, step=1, limit=4
    $region2: #{tpu_custom_call.1} parent=1 // loop_pre_header
      _
    $region3: #{tpu_custom_call.1} parent=1 // loop_header
      %s12 = sphi 0, %s16
      %p13 = scmp.ge.s32.totalorder %s12, 4
      %s19 = sphi 0, %s31
      %s20 = sphi 0, %s27
      %s21 = sphi 0, %s19
      %s22 = sphi 0, %s20
      %s23 = sphi 0, %s21
      %s24 = sphi 0, %s22
      %s36 = sphi 0, %s38
      %s39 = sphi 0, %s36
      %s40 = sphi 0, %s39
      %s56 = sphi 0, %s40
      %s62 = sphi 0, %s64
      %s65 = sphi 0, %s62
      %s66 = sphi 0, %s65
      %s82 = sphi 0, %s66
      %s88 = sphi 0, %s90
      %s91 = sphi 0, %s88
      %s92 = sphi 0, %s91
      %s108 = sphi 0, %s92
      %s116 = sphi 0, %s118
      %s119 = sphi 0, %s116
      %s120 = sphi 0, %s119
      %s136 = sphi 0, %s120
    $region4: #{tpu_custom_call.1} parent=1 // loop_header_branch
      %15 = sbr.rel (%p13) target = $region8
    $region5: #{tpu_custom_call.1} parent=1 // loop_body
      %s17 = ssub.s32 %s12, 1
      %s18 = ssub.s32 %s12, 2
      %s25 = sadd.s32 1, %s20
      %p26 = scmp.ge.s32.totalorder %s25, 1
      %s27 = scalar_select %p26, 0, %s25
      %s28 = sadd.s32 1, %s19
      %s29 = scalar_select %p26, %s28, %s19
      %p30 = scmp.ge.s32.totalorder %s29, 2
      %s31 = scalar_select %p30, 0, %s29
      %s32 = ssub.s32 %s19, %s31
      %s33 = ssub.s32 %s20, %s27
      %s34 = sor.u32 %s32, %s33
      %p35 = scmp.eq.s32.totalorder %s34, 0
      %s37 = sadd.s32 %s36, 1
      %s38 = scalar_select %p35, %s36, %s37
      %p41 = pneg %p35
      %p42 = scmp.eq.s32.totalorder %s12, 1
      %p43 = por %p41, %p42
      %p44 = scmp.ne.s32.totalorder %s36, %s39
      %p45 = scmp.eq.s32.totalorder %s12, 0
      %p46 = por %p44, %p45
      %p47 = scmp.ne.s32.totalorder %s36, %s39
      %p48 = scmp.eq.s32.totalorder %s17, 1
      %p49 = por %p47, %p48
      %p50 = scmp.ne.s32.totalorder %s39, %s40
      %p51 = scmp.eq.s32.totalorder %s17, 0
      %p52 = por %p50, %p51
      %p53 = scmp.ne.s32.totalorder %s39, %s40
      %p54 = scmp.eq.s32.totalorder %s18, 1
      %p55 = por %p53, %p54
      %p57 = scmp.ne.s32.totalorder %s40, %s56
      %p58 = scmp.eq.s32.totalorder %s18, 0
      %p59 = por %p57, %p58
      %s60 = ssub.s32 %s20, %s27
      %p61 = scmp.eq.s32.totalorder %s60, 0
      %s63 = sadd.s32 %s62, 1
      %s64 = scalar_select %p61, %s62, %s63
      %p67 = pneg %p61
      %p68 = scmp.eq.s32.totalorder %s12, 1
      %p69 = por %p67, %p68
      %p70 = scmp.ne.s32.totalorder %s62, %s65
      %p71 = scmp.eq.s32.totalorder %s12, 0
      %p72 = por %p70, %p71
      %p73 = scmp.ne.s32.totalorder %s62, %s65
      %p74 = scmp.eq.s32.totalorder %s17, 1
      %p75 = por %p73, %p74
      %p76 = scmp.ne.s32.totalorder %s65, %s66
      %p77 = scmp.eq.s32.totalorder %s17, 0
      %p78 = por %p76, %p77
      %p79 = scmp.ne.s32.totalorder %s65, %s66
      %p80 = scmp.eq.s32.totalorder %s18, 1
      %p81 = por %p79, %p80
      %p83 = scmp.ne.s32.totalorder %s66, %s82
      %p84 = scmp.eq.s32.totalorder %s18, 0
      %p85 = por %p83, %p84
      %s86 = ssub.s32 %s20, %s27
      %p87 = scmp.eq.s32.totalorder %s86, 0
      %s89 = sadd.s32 %s88, 1
      %s90 = scalar_select %p87, %s88, %s89
      %p93 = pneg %p87
      %p94 = scmp.eq.s32.totalorder %s12, 1
      %p95 = por %p93, %p94
      %p96 = scmp.ne.s32.totalorder %s88, %s91
      %p97 = scmp.eq.s32.totalorder %s12, 0
      %p98 = por %p96, %p97
      %p99 = scmp.ne.s32.totalorder %s88, %s91
      %p100 = scmp.eq.s32.totalorder %s17, 1
      %p101 = por %p99, %p100
      %p102 = scmp.ne.s32.totalorder %s91, %s92
      %p103 = scmp.eq.s32.totalorder %s17, 0
      %p104 = por %p102, %p103
      %p105 = scmp.ne.s32.totalorder %s91, %s92
      %p106 = scmp.eq.s32.totalorder %s18, 1
      %p107 = por %p105, %p106
      %p109 = scmp.ne.s32.totalorder %s92, %s108
      %p110 = scmp.eq.s32.totalorder %s18, 0
      %p111 = por %p109, %p110
      %s112 = ssub.s32 %s19, %s31
      %s113 = ssub.s32 %s20, %s27
      %s114 = sor.u32 %s112, %s113
      %p115 = scmp.eq.s32.totalorder %s114, 0
      %s117 = sadd.s32 %s116, 1
      %s118 = scalar_select %p115, %s116, %s117
      %p121 = pneg %p115
      %p122 = scmp.eq.s32.totalorder %s12, 1
      %p123 = por %p121, %p122
      %p124 = scmp.ne.s32.totalorder %s116, %s119
      %p125 = scmp.eq.s32.totalorder %s12, 0
      %p126 = por %p124, %p125
      %p127 = scmp.ne.s32.totalorder %s116, %s119
      %p128 = scmp.eq.s32.totalorder %s17, 1
      %p129 = por %p127, %p128
      %p130 = scmp.ne.s32.totalorder %s119, %s120
      %p131 = scmp.eq.s32.totalorder %s17, 0
      %p132 = por %p130, %p131
      %p133 = scmp.ne.s32.totalorder %s119, %s120
      %p134 = scmp.eq.s32.totalorder %s18, 1
      %p135 = por %p133, %p134
      %p137 = scmp.ne.s32.totalorder %s120, %s136
      %p138 = scmp.eq.s32.totalorder %s18, 0
      %p139 = por %p137, %p138
      %p140 = scmp.le.s32.totalorder 1, %s12
      %p141 = scmp.lt.s32.totalorder %s12, 3
      %p142 = pnand %p140, %p141
      %p143 = pneg %p142
      // Predicated region
      $region9: #{tpu_custom_call.1} parent=5 // pred_check
        _
      $region10: #{tpu_custom_call.1} parent=5 // pred_check_branch
        %145 = sbr.rel (%p142) target = $region12
      $region11: #{tpu_custom_call.1} parent=5 // pred_region
        %s146 = ssub.s32 %s12, 1
        // Predicated region
        $region13: #{tpu_custom_call.1} parent=11 // pred_check
          %p147 = pneg %p78
        $region14: #{tpu_custom_call.1} parent=11 // pred_check_branch
          %149 = sbr.rel (%p147) target = $region16
        $region15: #{tpu_custom_call.1} parent=11 // pred_region
          %p150 = scmp.lt.s32.totalorder %s22, 0
          %s151 = scalar_select %p150, %s22, 0
          %s152 = smul.addr %s151, 8
          %s153 = scalar_lea.vmem %s1, %s152
        $region16: #{tpu_custom_call.1} parent=11 // pred_fallthru
          _
        // Predicated region
        $region17: #{tpu_custom_call.1} parent=11 // pred_check
          %p154 = pneg %p104
        $region18: #{tpu_custom_call.1} parent=11 // pred_check_branch
          %156 = sbr.rel (%p154) target = $region20
        $region19: #{tpu_custom_call.1} parent=11 // pred_region
          %p157 = scmp.lt.s32.totalorder %s22, 0
          %s158 = scalar_select %p157, %s22, 0
          %s159 = scalar_lea.vmem %s2, %s158
        $region20: #{tpu_custom_call.1} parent=11 // pred_fallthru
          _
      $region12: #{tpu_custom_call.1} parent=5 // pred_fallthru
        _
      %p160 = scmp.lt.s32.totalorder %s12, 2
      // Predicated region
      $region21: #{tpu_custom_call.1} parent=5 // pred_check
        %p161 = pneg %p160
      $region22: #{tpu_custom_call.1} parent=5 // pred_check_branch
        %163 = sbr.rel (%p161) target = $region24
      $region23: #{tpu_custom_call.1} parent=5 // pred_region
        // Predicated region
        $region25: #{tpu_custom_call.1} parent=23 // pred_check
          %p164 = pneg %p46
        $region26: #{tpu_custom_call.1} parent=23 // pred_check_branch
          %166 = sbr.rel (%p164) target = $region28
        $region27: #{tpu_custom_call.1} parent=23 // pred_region
          %p167 = scmp.lt.s32.totalorder %s19, 1
          %s168 = scalar_select %p167, %s19, 1
          %p169 = scmp.lt.s32.totalorder %s20, 0
          %s170 = scalar_select %p169, %s20, 0
          %s171 = smul.addr %s168, 54
          %s172 = sadd.s32 %s170, %s171
          %s173 = smul.addr %s172, 8
          %s174 = scalar_lea.vmem %s0, %s173
        $region28: #{tpu_custom_call.1} parent=23 // pred_fallthru
          _
      $region24: #{tpu_custom_call.1} parent=5 // pred_fallthru
        _
      %p175 = scmp.le.s32.totalorder 1, %s12
      %p176 = scmp.lt.s32.totalorder %s12, 3
      %p177 = pnand %p175, %p176
      %p178 = pneg %p177
      // Predicated region
      $region29: #{tpu_custom_call.1} parent=5 // pred_check
        _
      $region30: #{tpu_custom_call.1} parent=5 // pred_check_branch
        %180 = sbr.rel (%p177) target = $region32
      $region31: #{tpu_custom_call.1} parent=5 // pred_region
        %s181 = ssub.s32 %s12, 1
        %p182 = scmp.lt.s32.totalorder %s21, 1
        %s183 = scalar_select %p182, %s21, 1
        %p184 = scmp.lt.s32.totalorder %s22, 0
        %s185 = scalar_select %p184, %s22, 0
        %s186 = smul.addr %s183, 54
        %s187 = sadd.s32 %s185, %s186
        %s188 = smul.addr %s187, 8
        %s189 = scalar_lea.vmem %s0, %s188
        %p190 = pneg %p52
        %p191 = pneg %p49
        %p192 = scmp.lt.s32.totalorder %s22, 0
        %s193 = scalar_select %p192, %s22, 0
        %s194 = smul.addr %s193, 8
        %s195 = scalar_lea.vmem %s1, %s194
        %p196 = pneg %p78
        %p197 = pneg %p75
        %p198 = scmp.lt.s32.totalorder %s22, 0
        %s199 = scalar_select %p198, %s22, 0
        %s200 = scalar_lea.vmem %s2, %s199
        %p201 = pneg %p104
        %p202 = pneg %p101
        %p203 = pneg %p132
        %p204 = pneg %p129
        %s205 = sand.u32 %s119, 1
        %s206 = scalar_lea.sflag [#allocation3], %s205
        %s207 = sand.u32 %s119, 1
        %s208 = smul.addr %s207, 256
        %s209 = scalar_lea.vmem [#allocation2], %s208
        %p210 = scmp.lt.s32.totalorder %s21, 1
        %s211 = scalar_select %p210, %s21, 1
        %p212 = scmp.lt.s32.totalorder %s22, 0
        %s213 = scalar_select %p212, %s22, 0
        %s214 = smul.addr %s211, 54
        %s215 = sadd.s32 %s213, %s214
        %s216 = smul.addr %s215, 8
        %s217 = scalar_lea.vmem %s0, %s216
        %p218 = scmp.lt.s32.totalorder %s22, 0
        %s219 = scalar_select %p218, %s22, 0
        %s220 = smul.addr %s219, 8
        %s221 = scalar_lea.vmem %s1, %s220
        %p222 = scmp.lt.s32.totalorder %s22, 0
        %s223 = scalar_select %p222, %s22, 0
        %s224 = scalar_lea.vmem %s2, %s223
        %v225 = vld [vmem:[%s224] sm:$0x1]
        %v227 = vlaneseq
        %v228 = vshrl.u32 %v227, 7
        %v229 = vsub.s32 0, %v228
        %v230 = vrot.slane %v225, %v229
        %v232 = vld [vmem:[%s221] sm:$0x1]
        %v233 = vld [vmem:[%s221 + $0x1] sm:$0x1]
        %v234 = vld [vmem:[%s221 + $0x2] sm:$0x1]
        %v235 = vld [vmem:[%s221 + $0x3] sm:$0x1]
        %v236 = vld [vmem:[%s221 + $0x4] sm:$0x1]
        %v237 = vld [vmem:[%s221 + $0x5] sm:$0x1]
        %v238 = vld [vmem:[%s221 + $0x6] sm:$0x1]
        %v239 = vld [vmem:[%s221 + $0x7] sm:$0x1]
        %v240 = vld [vmem:[%s221 + $0x8] sm:$0x1]
        %v241 = vld [vmem:[%s217] sm:$0xff]
        %v242 = vld [vmem:[%s217 + $0x8] sm:$0xff]
        %v243 = vld [vmem:[%s217 + $0x18] sm:$0xff]
        %v244 = vld [vmem:[%s217 + $0x20] sm:$0xff]
        %v245 = vld [vmem:[%s217 + $0x30] sm:$0xff]
        %v246 = vld [vmem:[%s217 + $0x38] sm:$0xff]
        %v247 = vld [vmem:[%s217 + $0x48] sm:$0xff]
        %v248 = vld [vmem:[%s217 + $0x50] sm:$0xff]
        %v249 = vld [vmem:[%s217 + $0x60] sm:$0xff]
        %v250 = vld [vmem:[%s217 + $0x68] sm:$0xff]
        %v251 = vld [vmem:[%s217 + $0x78] sm:$0xff]
        %v252 = vld [vmem:[%s217 + $0x80] sm:$0xff]
        %v253 = vld [vmem:[%s217 + $0x90] sm:$0xff]
        %v254 = vld [vmem:[%s217 + $0x98] sm:$0xff]
        %v255 = vld [vmem:[%s217 + $0xa8] sm:$0xff]
        %v256 = vld [vmem:[%s217 + $0xb0] sm:$0xff]
        %v257 = vld [vmem:[%s217 + $0xc0] sm:$0xff]
        %v258 = vld [vmem:[%s217 + $0xc8] sm:$0xff]
        %v259 = vld [vmem:[%s217 + $0xd8] sm:$0xff]
        %v260 = vld [vmem:[%s217 + $0xe0] sm:$0xff]
        %v261 = vld [vmem:[%s217 + $0xf0] sm:$0xff]
        %v262 = vld [vmem:[%s217 + $0xf8] sm:$0xff]
        %v263 = vld [vmem:[%s217 + $0x108] sm:$0xff]
        %v264 = vld [vmem:[%s217 + $0x110] sm:$0xff]
        %v265 = vld [vmem:[%s217 + $0x120] sm:$0xff]
        %v266 = vld [vmem:[%s217 + $0x128] sm:$0xff]
        %v267 = vld [vmem:[%s217 + $0x138] sm:$0xff]
        %v268 = vld [vmem:[%s217 + $0x140] sm:$0xff]
        %v269 = vld [vmem:[%s217 + $0x150] sm:$0xff]
        %v270 = vld [vmem:[%s217 + $0x158] sm:$0xff]
        %v271 = vld [vmem:[%s217 + $0x168] sm:$0xff]
        %v272 = vld [vmem:[%s217 + $0x170] sm:$0xff]
        %v273 = vlaneseq
        %v274 = vshrl.u32 %v273, 7
        %v275 = vsub.s32 0, %v274
        %v276 = vrot.slane %v232, %v275
        %v277 = vmul.f32 %v241, %v276
        %v278 = vmul.f32 %v242, %v276
        %v279 = vmul.f32 %v243, %v276
        %v280 = vmul.f32 %v244, %v276
        %v281 = vmul.f32 %v245, %v276
        %v282 = vmul.f32 %v246, %v276
        %v283 = vmul.f32 %v247, %v276
        %v284 = vmul.f32 %v248, %v276
        %v285 = vmul.f32 %v249, %v276
        %v286 = vmul.f32 %v250, %v276
        %v287 = vmul.f32 %v251, %v276
        %v288 = vmul.f32 %v252, %v276
        %v289 = vmul.f32 %v253, %v276
        %v290 = vmul.f32 %v254, %v276
        %v291 = vmul.f32 %v255, %v276
        %v292 = vmul.f32 %v256, %v276
        %v293 = vmul.f32 %v257, %v276
        %v294 = vmul.f32 %v258, %v276
        %v295 = vmul.f32 %v259, %v276
        %v296 = vmul.f32 %v260, %v276
        %v297 = vmul.f32 %v261, %v276
        %v298 = vmul.f32 %v262, %v276
        %v299 = vmul.f32 %v263, %v276
        %v300 = vmul.f32 %v264, %v276
        %v301 = vmul.f32 %v265, %v276
        %v302 = vmul.f32 %v266, %v276
        %v303 = vmul.f32 %v267, %v276
        %v304 = vmul.f32 %v268, %v276
        %v305 = vmul.f32 %v269, %v276
        %v306 = vmul.f32 %v270, %v276
        %v307 = vmul.f32 %v271, %v276
        %v308 = vmul.f32 %v272, %v276
        %v309 = vadd.f32 %v230, %v277
        %v310 = vadd.f32 %v230, %v278
        %v311 = vadd.f32 %v230, %v279
        %v312 = vadd.f32 %v230, %v280
        %v313 = vadd.f32 %v230, %v281
        %v314 = vadd.f32 %v230, %v282
        %v315 = vadd.f32 %v230, %v283
        %v316 = vadd.f32 %v230, %v284
        %v317 = vadd.f32 %v230, %v285
        %v318 = vadd.f32 %v230, %v286
        %v319 = vadd.f32 %v230, %v287
        %v320 = vadd.f32 %v230, %v288
        %v321 = vadd.f32 %v230, %v289
        %v322 = vadd.f32 %v230, %v290
        %v323 = vadd.f32 %v230, %v291
        %v324 = vadd.f32 %v230, %v292
        %v325 = vadd.f32 %v230, %v293
        %v326 = vadd.f32 %v230, %v294
        %v327 = vadd.f32 %v230, %v295
        %v328 = vadd.f32 %v230, %v296
        %v329 = vadd.f32 %v230, %v297
        %v330 = vadd.f32 %v230, %v298
        %v331 = vadd.f32 %v230, %v299
        %v332 = vadd.f32 %v230, %v300
        %v333 = vadd.f32 %v230, %v301
        %v334 = vadd.f32 %v230, %v302
        %v335 = vadd.f32 %v230, %v303
        %v336 = vadd.f32 %v230, %v304
        %v337 = vadd.f32 %v230, %v305
        %v338 = vadd.f32 %v230, %v306
        %v339 = vadd.f32 %v230, %v307
        %v340 = vadd.f32 %v230, %v308
        %v341 = vld [vmem:[%s217 + $0x1] sm:$0xff]
        %v342 = vld [vmem:[%s217 + $0x9] sm:$0xff]
        %v343 = vld [vmem:[%s217 + $0x19] sm:$0xff]
        %v344 = vld [vmem:[%s217 + $0x21] sm:$0xff]
        %v345 = vld [vmem:[%s217 + $0x31] sm:$0xff]
        %v346 = vld [vmem:[%s217 + $0x39] sm:$0xff]
        %v347 = vld [vmem:[%s217 + $0x49] sm:$0xff]
        %v348 = vld [vmem:[%s217 + $0x51] sm:$0xff]
        %v349 = vld [vmem:[%s217 + $0x61] sm:$0xff]
        %v350 = vld [vmem:[%s217 + $0x69] sm:$0xff]
        %v351 = vld [vmem:[%s217 + $0x79] sm:$0xff]
        %v352 = vld [vmem:[%s217 + $0x81] sm:$0xff]
        %v353 = vld [vmem:[%s217 + $0x91] sm:$0xff]
        %v354 = vld [vmem:[%s217 + $0x99] sm:$0xff]
        %v355 = vld [vmem:[%s217 + $0xa9] sm:$0xff]
        %v356 = vld [vmem:[%s217 + $0xb1] sm:$0xff]
        %v357 = vld [vmem:[%s217 + $0xc1] sm:$0xff]
        %v358 = vld [vmem:[%s217 + $0xc9] sm:$0xff]
        %v359 = vld [vmem:[%s217 + $0xd9] sm:$0xff]
        %v360 = vld [vmem:[%s217 + $0xe1] sm:$0xff]
        %v361 = vld [vmem:[%s217 + $0xf1] sm:$0xff]
        %v362 = vld [vmem:[%s217 + $0xf9] sm:$0xff]
        %v363 = vld [vmem:[%s217 + $0x109] sm:$0xff]
        %v364 = vld [vmem:[%s217 + $0x111] sm:$0xff]
        %v365 = vld [vmem:[%s217 + $0x121] sm:$0xff]
        %v366 = vld [vmem:[%s217 + $0x129] sm:$0xff]
        %v367 = vld [vmem:[%s217 + $0x139] sm:$0xff]
        %v368 = vld [vmem:[%s217 + $0x141] sm:$0xff]
        %v369 = vld [vmem:[%s217 + $0x151] sm:$0xff]
        %v370 = vld [vmem:[%s217 + $0x159] sm:$0xff]
        %v371 = vld [vmem:[%s217 + $0x169] sm:$0xff]
        %v372 = vld [vmem:[%s217 + $0x171] sm:$0xff]
        %v373 = vlaneseq
        %v374 = vshrl.u32 %v373, 7
        %v375 = vsub.s32 0, %v374
        %v376 = vrot.slane %v233, %v375
        %v377 = vmul.f32 %v341, %v376
        %v378 = vmul.f32 %v342, %v376
        %v379 = vmul.f32 %v343, %v376
        %v380 = vmul.f32 %v344, %v376
        %v381 = vmul.f32 %v345, %v376
        %v382 = vmul.f32 %v346, %v376
        %v383 = vmul.f32 %v347, %v376
        %v384 = vmul.f32 %v348, %v376
        %v385 = vmul.f32 %v349, %v376
        %v386 = vmul.f32 %v350, %v376
        %v387 = vmul.f32 %v351, %v376
        %v388 = vmul.f32 %v352, %v376
        %v389 = vmul.f32 %v353, %v376
        %v390 = vmul.f32 %v354, %v376
        %v391 = vmul.f32 %v355, %v376
        %v392 = vmul.f32 %v356, %v376
        %v393 = vmul.f32 %v357, %v376
        %v394 = vmul.f32 %v358, %v376
        %v395 = vmul.f32 %v359, %v376
        %v396 = vmul.f32 %v360, %v376
        %v397 = vmul.f32 %v361, %v376
        %v398 = vmul.f32 %v362, %v376
        %v399 = vmul.f32 %v363, %v376
        %v400 = vmul.f32 %v364, %v376
        %v401 = vmul.f32 %v365, %v376
        %v402 = vmul.f32 %v366, %v376
        %v403 = vmul.f32 %v367, %v376
        %v404 = vmul.f32 %v368, %v376
        %v405 = vmul.f32 %v369, %v376
        %v406 = vmul.f32 %v370, %v376
        %v407 = vmul.f32 %v371, %v376
        %v408 = vmul.f32 %v372, %v376
        %v409 = vadd.f32 %v309, %v377
        %v410 = vadd.f32 %v310, %v378
        %v411 = vadd.f32 %v311, %v379
        %v412 = vadd.f32 %v312, %v380
        %v413 = vadd.f32 %v313, %v381
        %v414 = vadd.f32 %v314, %v382
        %v415 = vadd.f32 %v315, %v383
        %v416 = vadd.f32 %v316, %v384
        %v417 = vadd.f32 %v317, %v385
        %v418 = vadd.f32 %v318, %v386
        %v419 = vadd.f32 %v319, %v387
        %v420 = vadd.f32 %v320, %v388
        %v421 = vadd.f32 %v321, %v389
        %v422 = vadd.f32 %v322, %v390
        %v423 = vadd.f32 %v323, %v391
        %v424 = vadd.f32 %v324, %v392
        %v425 = vadd.f32 %v325, %v393
        %v426 = vadd.f32 %v326, %v394
        %v427 = vadd.f32 %v327, %v395
        %v428 = vadd.f32 %v328, %v396
        %v429 = vadd.f32 %v329, %v397
        %v430 = vadd.f32 %v330, %v398
        %v431 = vadd.f32 %v331, %v399
        %v432 = vadd.f32 %v332, %v400
        %v433 = vadd.f32 %v333, %v401
        %v434 = vadd.f32 %v334, %v402
        %v435 = vadd.f32 %v335, %v403
        %v436 = vadd.f32 %v336, %v404
        %v437 = vadd.f32 %v337, %v405
        %v438 = vadd.f32 %v338, %v406
        %v439 = vadd.f32 %v339, %v407
        %v440 = vadd.f32 %v340, %v408
        %v441 = vld [vmem:[%s217 + $0x2] sm:$0xff]
        %v442 = vld [vmem:[%s217 + $0xa] sm:$0xff]
        %v443 = vld [vmem:[%s217 + $0x1a] sm:$0xff]
        %v444 = vld [vmem:[%s217 + $0x22] sm:$0xff]
        %v445 = vld [vmem:[%s217 + $0x32] sm:$0xff]
        %v446 = vld [vmem:[%s217 + $0x3a] sm:$0xff]
        %v447 = vld [vmem:[%s217 + $0x4a] sm:$0xff]
        %v448 = vld [vmem:[%s217 + $0x52] sm:$0xff]
        %v449 = vld [vmem:[%s217 + $0x62] sm:$0xff]
        %v450 = vld [vmem:[%s217 + $0x6a] sm:$0xff]
        %v451 = vld [vmem:[%s217 + $0x7a] sm:$0xff]
        %v452 = vld [vmem:[%s217 + $0x82] sm:$0xff]
        %v453 = vld [vmem:[%s217 + $0x92] sm:$0xff]
        %v454 = vld [vmem:[%s217 + $0x9a] sm:$0xff]
        %v455 = vld [vmem:[%s217 + $0xaa] sm:$0xff]
        %v456 = vld [vmem:[%s217 + $0xb2] sm:$0xff]
        %v457 = vld [vmem:[%s217 + $0xc2] sm:$0xff]
        %v458 = vld [vmem:[%s217 + $0xca] sm:$0xff]
        %v459 = vld [vmem:[%s217 + $0xda] sm:$0xff]
        %v460 = vld [vmem:[%s217 + $0xe2] sm:$0xff]
        %v461 = vld [vmem:[%s217 + $0xf2] sm:$0xff]
        %v462 = vld [vmem:[%s217 + $0xfa] sm:$0xff]
        %v463 = vld [vmem:[%s217 + $0x10a] sm:$0xff]
        %v464 = vld [vmem:[%s217 + $0x112] sm:$0xff]
        %v465 = vld [vmem:[%s217 + $0x122] sm:$0xff]
        %v466 = vld [vmem:[%s217 + $0x12a] sm:$0xff]
        %v467 = vld [vmem:[%s217 + $0x13a] sm:$0xff]
        %v468 = vld [vmem:[%s217 + $0x142] sm:$0xff]
        %v469 = vld [vmem:[%s217 + $0x152] sm:$0xff]
        %v470 = vld [vmem:[%s217 + $0x15a] sm:$0xff]
        %v471 = vld [vmem:[%s217 + $0x16a] sm:$0xff]
        %v472 = vld [vmem:[%s217 + $0x172] sm:$0xff]
        %v473 = vlaneseq
        %v474 = vshrl.u32 %v473, 7
        %v475 = vsub.s32 0, %v474
        %v476 = vrot.slane %v234, %v475
        %v477 = vmul.f32 %v441, %v476
        %v478 = vmul.f32 %v442, %v476
        %v479 = vmul.f32 %v443, %v476
        %v480 = vmul.f32 %v444, %v476
        %v481 = vmul.f32 %v445, %v476
        %v482 = vmul.f32 %v446, %v476
        %v483 = vmul.f32 %v447, %v476
        %v484 = vmul.f32 %v448, %v476
        %v485 = vmul.f32 %v449, %v476
        %v486 = vmul.f32 %v450, %v476
        %v487 = vmul.f32 %v451, %v476
        %v488 = vmul.f32 %v452, %v476
        %v489 = vmul.f32 %v453, %v476
        %v490 = vmul.f32 %v454, %v476
        %v491 = vmul.f32 %v455, %v476
        %v492 = vmul.f32 %v456, %v476
        %v493 = vmul.f32 %v457, %v476
        %v494 = vmul.f32 %v458, %v476
        %v495 = vmul.f32 %v459, %v476
        %v496 = vmul.f32 %v460, %v476
        %v497 = vmul.f32 %v461, %v476
        %v498 = vmul.f32 %v462, %v476
        %v499 = vmul.f32 %v463, %v476
        %v500 = vmul.f32 %v464, %v476
        %v501 = vmul.f32 %v465, %v476
        %v502 = vmul.f32 %v466, %v476
        %v503 = vmul.f32 %v467, %v476
        %v504 = vmul.f32 %v468, %v476
        %v505 = vmul.f32 %v469, %v476
        %v506 = vmul.f32 %v470, %v476
        %v507 = vmul.f32 %v471, %v476
        %v508 = vmul.f32 %v472, %v476
        %v509 = vadd.f32 %v409, %v477
        %v510 = vadd.f32 %v410, %v478
        %v511 = vadd.f32 %v411, %v479
        %v512 = vadd.f32 %v412, %v480
        %v513 = vadd.f32 %v413, %v481
        %v514 = vadd.f32 %v414, %v482
        %v515 = vadd.f32 %v415, %v483
        %v516 = vadd.f32 %v416, %v484
        %v517 = vadd.f32 %v417, %v485
        %v518 = vadd.f32 %v418, %v486
        %v519 = vadd.f32 %v419, %v487
        %v520 = vadd.f32 %v420, %v488
        %v521 = vadd.f32 %v421, %v489
        %v522 = vadd.f32 %v422, %v490
        %v523 = vadd.f32 %v423, %v491
        %v524 = vadd.f32 %v424, %v492
        %v525 = vadd.f32 %v425, %v493
        %v526 = vadd.f32 %v426, %v494
        %v527 = vadd.f32 %v427, %v495
        %v528 = vadd.f32 %v428, %v496
        %v529 = vadd.f32 %v429, %v497
        %v530 = vadd.f32 %v430, %v498
        %v531 = vadd.f32 %v431, %v499
        %v532 = vadd.f32 %v432, %v500
        %v533 = vadd.f32 %v433, %v501
        %v534 = vadd.f32 %v434, %v502
        %v535 = vadd.f32 %v435, %v503
        %v536 = vadd.f32 %v436, %v504
        %v537 = vadd.f32 %v437, %v505
        %v538 = vadd.f32 %v438, %v506
        %v539 = vadd.f32 %v439, %v507
        %v540 = vadd.f32 %v440, %v508
        %s541 = scalar_lea.vmem %s217, 24
        %v542 = vld [vmem:[%s541] sm:$0xff]
        %v543 = vld [vmem:[%s541 + $0x8] sm:$0xff]
        %v544 = vld [vmem:[%s541 + $0x18] sm:$0xff]
        %v545 = vld [vmem:[%s541 + $0x20] sm:$0xff]
        %v546 = vld [vmem:[%s541 + $0x30] sm:$0xff]
        %v547 = vld [vmem:[%s541 + $0x38] sm:$0xff]
        %v548 = vld [vmem:[%s541 + $0x48] sm:$0xff]
        %v549 = vld [vmem:[%s541 + $0x50] sm:$0xff]
        %v550 = vld [vmem:[%s541 + $0x60] sm:$0xff]
        %v551 = vld [vmem:[%s541 + $0x68] sm:$0xff]
        %v552 = vld [vmem:[%s541 + $0x78] sm:$0xff]
        %v553 = vld [vmem:[%s541 + $0x80] sm:$0xff]
        %v554 = vld [vmem:[%s541 + $0x90] sm:$0xff]
        %v555 = vld [vmem:[%s541 + $0x98] sm:$0xff]
        %v556 = vld [vmem:[%s541 + $0xa8] sm:$0xff]
        %v557 = vld [vmem:[%s541 + $0xb0] sm:$0xff]
        %v558 = vld [vmem:[%s541 + $0xc0] sm:$0xff]
        %v559 = vld [vmem:[%s541 + $0xc8] sm:$0xff]
        %v560 = vld [vmem:[%s541 + $0xd8] sm:$0xff]
        %v561 = vld [vmem:[%s541 + $0xe0] sm:$0xff]
        %v562 = vld [vmem:[%s541 + $0xf0] sm:$0xff]
        %v563 = vld [vmem:[%s541 + $0xf8] sm:$0xff]
        %v564 = vld [vmem:[%s541 + $0x108] sm:$0xff]
        %v565 = vld [vmem:[%s541 + $0x110] sm:$0xff]
        %v566 = vld [vmem:[%s541 + $0x120] sm:$0xff]
        %v567 = vld [vmem:[%s541 + $0x128] sm:$0xff]
        %v568 = vld [vmem:[%s541 + $0x138] sm:$0xff]
        %v569 = vld [vmem:[%s541 + $0x140] sm:$0xff]
        %v570 = vld [vmem:[%s541 + $0x150] sm:$0xff]
        %v571 = vld [vmem:[%s541 + $0x158] sm:$0xff]
        %v572 = vld [vmem:[%s541 + $0x168] sm:$0xff]
        %v573 = vld [vmem:[%s541 + $0x170] sm:$0xff]
        %v574 = vlaneseq
        %v575 = vshrl.u32 %v574, 7
        %v576 = vsub.s32 0, %v575
        %v577 = vrot.slane %v235, %v576
        %v578 = vmul.f32 %v542, %v577
        %v579 = vmul.f32 %v543, %v577
        %v580 = vmul.f32 %v544, %v577
        %v581 = vmul.f32 %v545, %v577
        %v582 = vmul.f32 %v546, %v577
        %v583 = vmul.f32 %v547, %v577
        %v584 = vmul.f32 %v548, %v577
        %v585 = vmul.f32 %v549, %v577
        %v586 = vmul.f32 %v550, %v577
        %v587 = vmul.f32 %v551, %v577
        %v588 = vmul.f32 %v552, %v577
        %v589 = vmul.f32 %v553, %v577
        %v590 = vmul.f32 %v554, %v577
        %v591 = vmul.f32 %v555, %v577
        %v592 = vmul.f32 %v556, %v577
        %v593 = vmul.f32 %v557, %v577
        %v594 = vmul.f32 %v558, %v577
        %v595 = vmul.f32 %v559, %v577
        %v596 = vmul.f32 %v560, %v577
        %v597 = vmul.f32 %v561, %v577
        %v598 = vmul.f32 %v562, %v577
        %v599 = vmul.f32 %v563, %v577
        %v600 = vmul.f32 %v564, %v577
        %v601 = vmul.f32 %v565, %v577
        %v602 = vmul.f32 %v566, %v577
        %v603 = vmul.f32 %v567, %v577
        %v604 = vmul.f32 %v568, %v577
        %v605 = vmul.f32 %v569, %v577
        %v606 = vmul.f32 %v570, %v577
        %v607 = vmul.f32 %v571, %v577
        %v608 = vmul.f32 %v572, %v577
        %v609 = vmul.f32 %v573, %v577
        %v610 = vadd.f32 %v509, %v578
        %v611 = vadd.f32 %v510, %v579
        %v612 = vadd.f32 %v511, %v580
        %v613 = vadd.f32 %v512, %v581
        %v614 = vadd.f32 %v513, %v582
        %v615 = vadd.f32 %v514, %v583
        %v616 = vadd.f32 %v515, %v584
        %v617 = vadd.f32 %v516, %v585
        %v618 = vadd.f32 %v517, %v586
        %v619 = vadd.f32 %v518, %v587
        %v620 = vadd.f32 %v519, %v588
        %v621 = vadd.f32 %v520, %v589
        %v622 = vadd.f32 %v521, %v590
        %v623 = vadd.f32 %v522, %v591
        %v624 = vadd.f32 %v523, %v592
        %v625 = vadd.f32 %v524, %v593
        %v626 = vadd.f32 %v525, %v594
        %v627 = vadd.f32 %v526, %v595
        %v628 = vadd.f32 %v527, %v596
        %v629 = vadd.f32 %v528, %v597
        %v630 = vadd.f32 %v529, %v598
        %v631 = vadd.f32 %v530, %v599
        %v632 = vadd.f32 %v531, %v600
        %v633 = vadd.f32 %v532, %v601
        %v634 = vadd.f32 %v533, %v602
        %v635 = vadd.f32 %v534, %v603
        %v636 = vadd.f32 %v535, %v604
        %v637 = vadd.f32 %v536, %v605
        %v638 = vadd.f32 %v537, %v606
        %v639 = vadd.f32 %v538, %v607
        %v640 = vadd.f32 %v539, %v608
        %v641 = vadd.f32 %v540, %v609
        %v642 = vld [vmem:[%s541 + $0x1] sm:$0xff]
        %v643 = vld [vmem:[%s541 + $0x9] sm:$0xff]
        %v644 = vld [vmem:[%s541 + $0x19] sm:$0xff]
        %v645 = vld [vmem:[%s541 + $0x21] sm:$0xff]
        %v646 = vld [vmem:[%s541 + $0x31] sm:$0xff]
        %v647 = vld [vmem:[%s541 + $0x39] sm:$0xff]
        %v648 = vld [vmem:[%s541 + $0x49] sm:$0xff]
        %v649 = vld [vmem:[%s541 + $0x51] sm:$0xff]
        %v650 = vld [vmem:[%s541 + $0x61] sm:$0xff]
        %v651 = vld [vmem:[%s541 + $0x69] sm:$0xff]
        %v652 = vld [vmem:[%s541 + $0x79] sm:$0xff]
        %v653 = vld [vmem:[%s541 + $0x81] sm:$0xff]
        %v654 = vld [vmem:[%s541 + $0x91] sm:$0xff]
        %v655 = vld [vmem:[%s541 + $0x99] sm:$0xff]
        %v656 = vld [vmem:[%s541 + $0xa9] sm:$0xff]
        %v657 = vld [vmem:[%s541 + $0xb1] sm:$0xff]
        %v658 = vld [vmem:[%s541 + $0xc1] sm:$0xff]
        %v659 = vld [vmem:[%s541 + $0xc9] sm:$0xff]
        %v660 = vld [vmem:[%s541 + $0xd9] sm:$0xff]
        %v661 = vld [vmem:[%s541 + $0xe1] sm:$0xff]
        %v662 = vld [vmem:[%s541 + $0xf1] sm:$0xff]
        %v663 = vld [vmem:[%s541 + $0xf9] sm:$0xff]
        %v664 = vld [vmem:[%s541 + $0x109] sm:$0xff]
        %v665 = vld [vmem:[%s541 + $0x111] sm:$0xff]
        %v666 = vld [vmem:[%s541 + $0x121] sm:$0xff]
        %v667 = vld [vmem:[%s541 + $0x129] sm:$0xff]
        %v668 = vld [vmem:[%s541 + $0x139] sm:$0xff]
        %v669 = vld [vmem:[%s541 + $0x141] sm:$0xff]
        %v670 = vld [vmem:[%s541 + $0x151] sm:$0xff]
        %v671 = vld [vmem:[%s541 + $0x159] sm:$0xff]
        %v672 = vld [vmem:[%s541 + $0x169] sm:$0xff]
        %v673 = vld [vmem:[%s541 + $0x171] sm:$0xff]
        %v674 = vlaneseq
        %v675 = vshrl.u32 %v674, 7
        %v676 = vsub.s32 0, %v675
        %v677 = vrot.slane %v236, %v676
        %v678 = vmul.f32 %v642, %v677
        %v679 = vmul.f32 %v643, %v677
        %v680 = vmul.f32 %v644, %v677
        %v681 = vmul.f32 %v645, %v677
        %v682 = vmul.f32 %v646, %v677
        %v683 = vmul.f32 %v647, %v677
        %v684 = vmul.f32 %v648, %v677
        %v685 = vmul.f32 %v649, %v677
        %v686 = vmul.f32 %v650, %v677
        %v687 = vmul.f32 %v651, %v677
        %v688 = vmul.f32 %v652, %v677
        %v689 = vmul.f32 %v653, %v677
        %v690 = vmul.f32 %v654, %v677
        %v691 = vmul.f32 %v655, %v677
        %v692 = vmul.f32 %v656, %v677
        %v693 = vmul.f32 %v657, %v677
        %v694 = vmul.f32 %v658, %v677
        %v695 = vmul.f32 %v659, %v677
        %v696 = vmul.f32 %v660, %v677
        %v697 = vmul.f32 %v661, %v677
        %v698 = vmul.f32 %v662, %v677
        %v699 = vmul.f32 %v663, %v677
        %v700 = vmul.f32 %v664, %v677
        %v701 = vmul.f32 %v665, %v677
        %v702 = vmul.f32 %v666, %v677
        %v703 = vmul.f32 %v667, %v677
        %v704 = vmul.f32 %v668, %v677
        %v705 = vmul.f32 %v669, %v677
        %v706 = vmul.f32 %v670, %v677
        %v707 = vmul.f32 %v671, %v677
        %v708 = vmul.f32 %v672, %v677
        %v709 = vmul.f32 %v673, %v677
        %v710 = vadd.f32 %v610, %v678
        %v711 = vadd.f32 %v611, %v679
        %v712 = vadd.f32 %v612, %v680
        %v713 = vadd.f32 %v613, %v681
        %v714 = vadd.f32 %v614, %v682
        %v715 = vadd.f32 %v615, %v683
        %v716 = vadd.f32 %v616, %v684
        %v717 = vadd.f32 %v617, %v685
        %v718 = vadd.f32 %v618, %v686
        %v719 = vadd.f32 %v619, %v687
        %v720 = vadd.f32 %v620, %v688
        %v721 = vadd.f32 %v621, %v689
        %v722 = vadd.f32 %v622, %v690
        %v723 = vadd.f32 %v623, %v691
        %v724 = vadd.f32 %v624, %v692
        %v725 = vadd.f32 %v625, %v693
        %v726 = vadd.f32 %v626, %v694
        %v727 = vadd.f32 %v627, %v695
        %v728 = vadd.f32 %v628, %v696
        %v729 = vadd.f32 %v629, %v697
        %v730 = vadd.f32 %v630, %v698
        %v731 = vadd.f32 %v631, %v699
        %v732 = vadd.f32 %v632, %v700
        %v733 = vadd.f32 %v633, %v701
        %v734 = vadd.f32 %v634, %v702
        %v735 = vadd.f32 %v635, %v703
        %v736 = vadd.f32 %v636, %v704
        %v737 = vadd.f32 %v637, %v705
        %v738 = vadd.f32 %v638, %v706
        %v739 = vadd.f32 %v639, %v707
        %v740 = vadd.f32 %v640, %v708
        %v741 = vadd.f32 %v641, %v709
        %v742 = vld [vmem:[%s541 + $0x2] sm:$0xff]
        %v743 = vld [vmem:[%s541 + $0xa] sm:$0xff]
        %v744 = vld [vmem:[%s541 + $0x1a] sm:$0xff]
        %v745 = vld [vmem:[%s541 + $0x22] sm:$0xff]
        %v746 = vld [vmem:[%s541 + $0x32] sm:$0xff]
        %v747 = vld [vmem:[%s541 + $0x3a] sm:$0xff]
        %v748 = vld [vmem:[%s541 + $0x4a] sm:$0xff]
        %v749 = vld [vmem:[%s541 + $0x52] sm:$0xff]
        %v750 = vld [vmem:[%s541 + $0x62] sm:$0xff]
        %v751 = vld [vmem:[%s541 + $0x6a] sm:$0xff]
        %v752 = vld [vmem:[%s541 + $0x7a] sm:$0xff]
        %v753 = vld [vmem:[%s541 + $0x82] sm:$0xff]
        %v754 = vld [vmem:[%s541 + $0x92] sm:$0xff]
        %v755 = vld [vmem:[%s541 + $0x9a] sm:$0xff]
        %v756 = vld [vmem:[%s541 + $0xaa] sm:$0xff]
        %v757 = vld [vmem:[%s541 + $0xb2] sm:$0xff]
        %v758 = vld [vmem:[%s541 + $0xc2] sm:$0xff]
        %v759 = vld [vmem:[%s541 + $0xca] sm:$0xff]
        %v760 = vld [vmem:[%s541 + $0xda] sm:$0xff]
        %v761 = vld [vmem:[%s541 + $0xe2] sm:$0xff]
        %v762 = vld [vmem:[%s541 + $0xf2] sm:$0xff]
        %v763 = vld [vmem:[%s541 + $0xfa] sm:$0xff]
        %v764 = vld [vmem:[%s541 + $0x10a] sm:$0xff]
        %v765 = vld [vmem:[%s541 + $0x112] sm:$0xff]
        %v766 = vld [vmem:[%s541 + $0x122] sm:$0xff]
        %v767 = vld [vmem:[%s541 + $0x12a] sm:$0xff]
        %v768 = vld [vmem:[%s541 + $0x13a] sm:$0xff]
        %v769 = vld [vmem:[%s541 + $0x142] sm:$0xff]
        %v770 = vld [vmem:[%s541 + $0x152] sm:$0xff]
        %v771 = vld [vmem:[%s541 + $0x15a] sm:$0xff]
        %v772 = vld [vmem:[%s541 + $0x16a] sm:$0xff]
        %v773 = vld [vmem:[%s541 + $0x172] sm:$0xff]
        %v774 = vlaneseq
        %v775 = vshrl.u32 %v774, 7
        %v776 = vsub.s32 0, %v775
        %v777 = vrot.slane %v237, %v776
        %v778 = vmul.f32 %v742, %v777
        %v779 = vmul.f32 %v743, %v777
        %v780 = vmul.f32 %v744, %v777
        %v781 = vmul.f32 %v745, %v777
        %v782 = vmul.f32 %v746, %v777
        %v783 = vmul.f32 %v747, %v777
        %v784 = vmul.f32 %v748, %v777
        %v785 = vmul.f32 %v749, %v777
        %v786 = vmul.f32 %v750, %v777
        %v787 = vmul.f32 %v751, %v777
        %v788 = vmul.f32 %v752, %v777
        %v789 = vmul.f32 %v753, %v777
        %v790 = vmul.f32 %v754, %v777
        %v791 = vmul.f32 %v755, %v777
        %v792 = vmul.f32 %v756, %v777
        %v793 = vmul.f32 %v757, %v777
        %v794 = vmul.f32 %v758, %v777
        %v795 = vmul.f32 %v759, %v777
        %v796 = vmul.f32 %v760, %v777
        %v797 = vmul.f32 %v761, %v777
        %v798 = vmul.f32 %v762, %v777
        %v799 = vmul.f32 %v763, %v777
        %v800 = vmul.f32 %v764, %v777
        %v801 = vmul.f32 %v765, %v777
        %v802 = vmul.f32 %v766, %v777
        %v803 = vmul.f32 %v767, %v777
        %v804 = vmul.f32 %v768, %v777
        %v805 = vmul.f32 %v769, %v777
        %v806 = vmul.f32 %v770, %v777
        %v807 = vmul.f32 %v771, %v777
        %v808 = vmul.f32 %v772, %v777
        %v809 = vmul.f32 %v773, %v777
        %v810 = vadd.f32 %v710, %v778
        %v811 = vadd.f32 %v711, %v779
        %v812 = vadd.f32 %v712, %v780
        %v813 = vadd.f32 %v713, %v781
        %v814 = vadd.f32 %v714, %v782
        %v815 = vadd.f32 %v715, %v783
        %v816 = vadd.f32 %v716, %v784
        %v817 = vadd.f32 %v717, %v785
        %v818 = vadd.f32 %v718, %v786
        %v819 = vadd.f32 %v719, %v787
        %v820 = vadd.f32 %v720, %v788
        %v821 = vadd.f32 %v721, %v789
        %v822 = vadd.f32 %v722, %v790
        %v823 = vadd.f32 %v723, %v791
        %v824 = vadd.f32 %v724, %v792
        %v825 = vadd.f32 %v725, %v793
        %v826 = vadd.f32 %v726, %v794
        %v827 = vadd.f32 %v727, %v795
        %v828 = vadd.f32 %v728, %v796
        %v829 = vadd.f32 %v729, %v797
        %v830 = vadd.f32 %v730, %v798
        %v831 = vadd.f32 %v731, %v799
        %v832 = vadd.f32 %v732, %v800
        %v833 = vadd.f32 %v733, %v801
        %v834 = vadd.f32 %v734, %v802
        %v835 = vadd.f32 %v735, %v803
        %v836 = vadd.f32 %v736, %v804
        %v837 = vadd.f32 %v737, %v805
        %v838 = vadd.f32 %v738, %v806
        %v839 = vadd.f32 %v739, %v807
        %v840 = vadd.f32 %v740, %v808
        %v841 = vadd.f32 %v741, %v809
        %s842 = scalar_lea.vmem %s217, 48
        %v843 = vld [vmem:[%s842] sm:$0xff]
        %v844 = vld [vmem:[%s842 + $0x8] sm:$0xff]
        %v845 = vld [vmem:[%s842 + $0x18] sm:$0xff]
        %v846 = vld [vmem:[%s842 + $0x20] sm:$0xff]
        %v847 = vld [vmem:[%s842 + $0x30] sm:$0xff]
        %v848 = vld [vmem:[%s842 + $0x38] sm:$0xff]
        %v849 = vld [vmem:[%s842 + $0x48] sm:$0xff]
        %v850 = vld [vmem:[%s842 + $0x50] sm:$0xff]
        %v851 = vld [vmem:[%s842 + $0x60] sm:$0xff]
        %v852 = vld [vmem:[%s842 + $0x68] sm:$0xff]
        %v853 = vld [vmem:[%s842 + $0x78] sm:$0xff]
        %v854 = vld [vmem:[%s842 + $0x80] sm:$0xff]
        %v855 = vld [vmem:[%s842 + $0x90] sm:$0xff]
        %v856 = vld [vmem:[%s842 + $0x98] sm:$0xff]
        %v857 = vld [vmem:[%s842 + $0xa8] sm:$0xff]
        %v858 = vld [vmem:[%s842 + $0xb0] sm:$0xff]
        %v859 = vld [vmem:[%s842 + $0xc0] sm:$0xff]
        %v860 = vld [vmem:[%s842 + $0xc8] sm:$0xff]
        %v861 = vld [vmem:[%s842 + $0xd8] sm:$0xff]
        %v862 = vld [vmem:[%s842 + $0xe0] sm:$0xff]
        %v863 = vld [vmem:[%s842 + $0xf0] sm:$0xff]
        %v864 = vld [vmem:[%s842 + $0xf8] sm:$0xff]
        %v865 = vld [vmem:[%s842 + $0x108] sm:$0xff]
        %v866 = vld [vmem:[%s842 + $0x110] sm:$0xff]
        %v867 = vld [vmem:[%s842 + $0x120] sm:$0xff]
        %v868 = vld [vmem:[%s842 + $0x128] sm:$0xff]
        %v869 = vld [vmem:[%s842 + $0x138] sm:$0xff]
        %v870 = vld [vmem:[%s842 + $0x140] sm:$0xff]
        %v871 = vld [vmem:[%s842 + $0x150] sm:$0xff]
        %v872 = vld [vmem:[%s842 + $0x158] sm:$0xff]
        %v873 = vld [vmem:[%s842 + $0x168] sm:$0xff]
        %v874 = vld [vmem:[%s842 + $0x170] sm:$0xff]
        %v875 = vlaneseq
        %v876 = vshrl.u32 %v875, 7
        %v877 = vsub.s32 0, %v876
        %v878 = vrot.slane %v238, %v877
        %v879 = vmul.f32 %v843, %v878
        %v880 = vmul.f32 %v844, %v878
        %v881 = vmul.f32 %v845, %v878
        %v882 = vmul.f32 %v846, %v878
        %v883 = vmul.f32 %v847, %v878
        %v884 = vmul.f32 %v848, %v878
        %v885 = vmul.f32 %v849, %v878
        %v886 = vmul.f32 %v850, %v878
        %v887 = vmul.f32 %v851, %v878
        %v888 = vmul.f32 %v852, %v878
        %v889 = vmul.f32 %v853, %v878
        %v890 = vmul.f32 %v854, %v878
        %v891 = vmul.f32 %v855, %v878
        %v892 = vmul.f32 %v856, %v878
        %v893 = vmul.f32 %v857, %v878
        %v894 = vmul.f32 %v858, %v878
        %v895 = vmul.f32 %v859, %v878
        %v896 = vmul.f32 %v860, %v878
        %v897 = vmul.f32 %v861, %v878
        %v898 = vmul.f32 %v862, %v878
        %v899 = vmul.f32 %v863, %v878
        %v900 = vmul.f32 %v864, %v878
        %v901 = vmul.f32 %v865, %v878
        %v902 = vmul.f32 %v866, %v878
        %v903 = vmul.f32 %v867, %v878
        %v904 = vmul.f32 %v868, %v878
        %v905 = vmul.f32 %v869, %v878
        %v906 = vmul.f32 %v870, %v878
        %v907 = vmul.f32 %v871, %v878
        %v908 = vmul.f32 %v872, %v878
        %v909 = vmul.f32 %v873, %v878
        %v910 = vmul.f32 %v874, %v878
        %v911 = vadd.f32 %v810, %v879
        %v912 = vadd.f32 %v811, %v880
        %v913 = vadd.f32 %v812, %v881
        %v914 = vadd.f32 %v813, %v882
        %v915 = vadd.f32 %v814, %v883
        %v916 = vadd.f32 %v815, %v884
        %v917 = vadd.f32 %v816, %v885
        %v918 = vadd.f32 %v817, %v886
        %v919 = vadd.f32 %v818, %v887
        %v920 = vadd.f32 %v819, %v888
        %v921 = vadd.f32 %v820, %v889
        %v922 = vadd.f32 %v821, %v890
        %v923 = vadd.f32 %v822, %v891
        %v924 = vadd.f32 %v823, %v892
        %v925 = vadd.f32 %v824, %v893
        %v926 = vadd.f32 %v825, %v894
        %v927 = vadd.f32 %v826, %v895
        %v928 = vadd.f32 %v827, %v896
        %v929 = vadd.f32 %v828, %v897
        %v930 = vadd.f32 %v829, %v898
        %v931 = vadd.f32 %v830, %v899
        %v932 = vadd.f32 %v831, %v900
        %v933 = vadd.f32 %v832, %v901
        %v934 = vadd.f32 %v833, %v902
        %v935 = vadd.f32 %v834, %v903
        %v936 = vadd.f32 %v835, %v904
        %v937 = vadd.f32 %v836, %v905
        %v938 = vadd.f32 %v837, %v906
        %v939 = vadd.f32 %v838, %v907
        %v940 = vadd.f32 %v839, %v908
        %v941 = vadd.f32 %v840, %v909
        %v942 = vadd.f32 %v841, %v910
        %v943 = vld [vmem:[%s842 + $0x1] sm:$0xff]
        %v944 = vld [vmem:[%s842 + $0x9] sm:$0xff]
        %v945 = vld [vmem:[%s842 + $0x19] sm:$0xff]
        %v946 = vld [vmem:[%s842 + $0x21] sm:$0xff]
        %v947 = vld [vmem:[%s842 + $0x31] sm:$0xff]
        %v948 = vld [vmem:[%s842 + $0x39] sm:$0xff]
        %v949 = vld [vmem:[%s842 + $0x49] sm:$0xff]
        %v950 = vld [vmem:[%s842 + $0x51] sm:$0xff]
        %v951 = vld [vmem:[%s842 + $0x61] sm:$0xff]
        %v952 = vld [vmem:[%s842 + $0x69] sm:$0xff]
        %v953 = vld [vmem:[%s842 + $0x79] sm:$0xff]
        %v954 = vld [vmem:[%s842 + $0x81] sm:$0xff]
        %v955 = vld [vmem:[%s842 + $0x91] sm:$0xff]
        %v956 = vld [vmem:[%s842 + $0x99] sm:$0xff]
        %v957 = vld [vmem:[%s842 + $0xa9] sm:$0xff]
        %v958 = vld [vmem:[%s842 + $0xb1] sm:$0xff]
        %v959 = vld [vmem:[%s842 + $0xc1] sm:$0xff]
        %v960 = vld [vmem:[%s842 + $0xc9] sm:$0xff]
        %v961 = vld [vmem:[%s842 + $0xd9] sm:$0xff]
        %v962 = vld [vmem:[%s842 + $0xe1] sm:$0xff]
        %v963 = vld [vmem:[%s842 + $0xf1] sm:$0xff]
        %v964 = vld [vmem:[%s842 + $0xf9] sm:$0xff]
        %v965 = vld [vmem:[%s842 + $0x109] sm:$0xff]
        %v966 = vld [vmem:[%s842 + $0x111] sm:$0xff]
        %v967 = vld [vmem:[%s842 + $0x121] sm:$0xff]
        %v968 = vld [vmem:[%s842 + $0x129] sm:$0xff]
        %v969 = vld [vmem:[%s842 + $0x139] sm:$0xff]
        %v970 = vld [vmem:[%s842 + $0x141] sm:$0xff]
        %v971 = vld [vmem:[%s842 + $0x151] sm:$0xff]
        %v972 = vld [vmem:[%s842 + $0x159] sm:$0xff]
        %v973 = vld [vmem:[%s842 + $0x169] sm:$0xff]
        %v974 = vld [vmem:[%s842 + $0x171] sm:$0xff]
        %v975 = vlaneseq
        %v976 = vshrl.u32 %v975, 7
        %v977 = vsub.s32 0, %v976
        %v978 = vrot.slane %v239, %v977
        %v979 = vmul.f32 %v943, %v978
        %v980 = vmul.f32 %v944, %v978
        %v981 = vmul.f32 %v945, %v978
        %v982 = vmul.f32 %v946, %v978
        %v983 = vmul.f32 %v947, %v978
        %v984 = vmul.f32 %v948, %v978
        %v985 = vmul.f32 %v949, %v978
        %v986 = vmul.f32 %v950, %v978
        %v987 = vmul.f32 %v951, %v978
        %v988 = vmul.f32 %v952, %v978
        %v989 = vmul.f32 %v953, %v978
        %v990 = vmul.f32 %v954, %v978
        %v991 = vmul.f32 %v955, %v978
        %v992 = vmul.f32 %v956, %v978
        %v993 = vmul.f32 %v957, %v978
        %v994 = vmul.f32 %v958, %v978
        %v995 = vmul.f32 %v959, %v978
        %v996 = vmul.f32 %v960, %v978
        %v997 = vmul.f32 %v961, %v978
        %v998 = vmul.f32 %v962, %v978
        %v999 = vmul.f32 %v963, %v978
        %v1000 = vmul.f32 %v964, %v978
        %v1001 = vmul.f32 %v965, %v978
        %v1002 = vmul.f32 %v966, %v978
        %v1003 = vmul.f32 %v967, %v978
        %v1004 = vmul.f32 %v968, %v978
        %v1005 = vmul.f32 %v969, %v978
        %v1006 = vmul.f32 %v970, %v978
        %v1007 = vmul.f32 %v971, %v978
        %v1008 = vmul.f32 %v972, %v978
        %v1009 = vmul.f32 %v973, %v978
        %v1010 = vmul.f32 %v974, %v978
        %v1011 = vadd.f32 %v911, %v979
        %v1012 = vadd.f32 %v912, %v980
        %v1013 = vadd.f32 %v913, %v981
        %v1014 = vadd.f32 %v914, %v982
        %v1015 = vadd.f32 %v915, %v983
        %v1016 = vadd.f32 %v916, %v984
        %v1017 = vadd.f32 %v917, %v985
        %v1018 = vadd.f32 %v918, %v986
        %v1019 = vadd.f32 %v919, %v987
        %v1020 = vadd.f32 %v920, %v988
        %v1021 = vadd.f32 %v921, %v989
        %v1022 = vadd.f32 %v922, %v990
        %v1023 = vadd.f32 %v923, %v991
        %v1024 = vadd.f32 %v924, %v992
        %v1025 = vadd.f32 %v925, %v993
        %v1026 = vadd.f32 %v926, %v994
        %v1027 = vadd.f32 %v927, %v995
        %v1028 = vadd.f32 %v928, %v996
        %v1029 = vadd.f32 %v929, %v997
        %v1030 = vadd.f32 %v930, %v998
        %v1031 = vadd.f32 %v931, %v999
        %v1032 = vadd.f32 %v932, %v1000
        %v1033 = vadd.f32 %v933, %v1001
        %v1034 = vadd.f32 %v934, %v1002
        %v1035 = vadd.f32 %v935, %v1003
        %v1036 = vadd.f32 %v936, %v1004
        %v1037 = vadd.f32 %v937, %v1005
        %v1038 = vadd.f32 %v938, %v1006
        %v1039 = vadd.f32 %v939, %v1007
        %v1040 = vadd.f32 %v940, %v1008
        %v1041 = vadd.f32 %v941, %v1009
        %v1042 = vadd.f32 %v942, %v1010
        %v1043 = vld [vmem:[%s842 + $0x2] sm:$0xff]
        %v1044 = vld [vmem:[%s842 + $0xa] sm:$0xff]
        %v1045 = vld [vmem:[%s842 + $0x1a] sm:$0xff]
        %v1046 = vld [vmem:[%s842 + $0x22] sm:$0xff]
        %v1047 = vld [vmem:[%s842 + $0x32] sm:$0xff]
        %v1048 = vld [vmem:[%s842 + $0x3a] sm:$0xff]
        %v1049 = vld [vmem:[%s842 + $0x4a] sm:$0xff]
        %v1050 = vld [vmem:[%s842 + $0x52] sm:$0xff]
        %v1051 = vld [vmem:[%s842 + $0x62] sm:$0xff]
        %v1052 = vld [vmem:[%s842 + $0x6a] sm:$0xff]
        %v1053 = vld [vmem:[%s842 + $0x7a] sm:$0xff]
        %v1054 = vld [vmem:[%s842 + $0x82] sm:$0xff]
        %v1055 = vld [vmem:[%s842 + $0x92] sm:$0xff]
        %v1056 = vld [vmem:[%s842 + $0x9a] sm:$0xff]
        %v1057 = vld [vmem:[%s842 + $0xaa] sm:$0xff]
        %v1058 = vld [vmem:[%s842 + $0xb2] sm:$0xff]
        %v1059 = vld [vmem:[%s842 + $0xc2] sm:$0xff]
        %v1060 = vld [vmem:[%s842 + $0xca] sm:$0xff]
        %v1061 = vld [vmem:[%s842 + $0xda] sm:$0xff]
        %v1062 = vld [vmem:[%s842 + $0xe2] sm:$0xff]
        %v1063 = vld [vmem:[%s842 + $0xf2] sm:$0xff]
        %v1064 = vld [vmem:[%s842 + $0xfa] sm:$0xff]
        %v1065 = vld [vmem:[%s842 + $0x10a] sm:$0xff]
        %v1066 = vld [vmem:[%s842 + $0x112] sm:$0xff]
        %v1067 = vld [vmem:[%s842 + $0x122] sm:$0xff]
        %v1068 = vld [vmem:[%s842 + $0x12a] sm:$0xff]
        %v1069 = vld [vmem:[%s842 + $0x13a] sm:$0xff]
        %v1070 = vld [vmem:[%s842 + $0x142] sm:$0xff]
        %v1071 = vld [vmem:[%s842 + $0x152] sm:$0xff]
        %v1072 = vld [vmem:[%s842 + $0x15a] sm:$0xff]
        %v1073 = vld [vmem:[%s842 + $0x16a] sm:$0xff]
        %v1074 = vld [vmem:[%s842 + $0x172] sm:$0xff]
        %v1075 = vlaneseq
        %v1076 = vshrl.u32 %v1075, 7
        %v1077 = vsub.s32 0, %v1076
        %v1078 = vrot.slane %v240, %v1077
        %v1079 = vmul.f32 %v1043, %v1078
        %v1080 = vmul.f32 %v1044, %v1078
        %v1081 = vmul.f32 %v1045, %v1078
        %v1082 = vmul.f32 %v1046, %v1078
        %v1083 = vmul.f32 %v1047, %v1078
        %v1084 = vmul.f32 %v1048, %v1078
        %v1085 = vmul.f32 %v1049, %v1078
        %v1086 = vmul.f32 %v1050, %v1078
        %v1087 = vmul.f32 %v1051, %v1078
        %v1088 = vmul.f32 %v1052, %v1078
        %v1089 = vmul.f32 %v1053, %v1078
        %v1090 = vmul.f32 %v1054, %v1078
        %v1091 = vmul.f32 %v1055, %v1078
        %v1092 = vmul.f32 %v1056, %v1078
        %v1093 = vmul.f32 %v1057, %v1078
        %v1094 = vmul.f32 %v1058, %v1078
        %v1095 = vmul.f32 %v1059, %v1078
        %v1096 = vmul.f32 %v1060, %v1078
        %v1097 = vmul.f32 %v1061, %v1078
        %v1098 = vmul.f32 %v1062, %v1078
        %v1099 = vmul.f32 %v1063, %v1078
        %v1100 = vmul.f32 %v1064, %v1078
        %v1101 = vmul.f32 %v1065, %v1078
        %v1102 = vmul.f32 %v1066, %v1078
        %v1103 = vmul.f32 %v1067, %v1078
        %v1104 = vmul.f32 %v1068, %v1078
        %v1105 = vmul.f32 %v1069, %v1078
        %v1106 = vmul.f32 %v1070, %v1078
        %v1107 = vmul.f32 %v1071, %v1078
        %v1108 = vmul.f32 %v1072, %v1078
        %v1109 = vmul.f32 %v1073, %v1078
        %v1110 = vmul.f32 %v1074, %v1078
        %v1111 = vadd.f32 %v1011, %v1079
        %v1112 = vadd.f32 %v1012, %v1080
        %v1113 = vadd.f32 %v1013, %v1081
        %v1114 = vadd.f32 %v1014, %v1082
        %v1115 = vadd.f32 %v1015, %v1083
        %v1116 = vadd.f32 %v1016, %v1084
        %v1117 = vadd.f32 %v1017, %v1085
        %v1118 = vadd.f32 %v1018, %v1086
        %v1119 = vadd.f32 %v1019, %v1087
        %v1120 = vadd.f32 %v1020, %v1088
        %v1121 = vadd.f32 %v1021, %v1089
        %v1122 = vadd.f32 %v1022, %v1090
        %v1123 = vadd.f32 %v1023, %v1091
        %v1124 = vadd.f32 %v1024, %v1092
        %v1125 = vadd.f32 %v1025, %v1093
        %v1126 = vadd.f32 %v1026, %v1094
        %v1127 = vadd.f32 %v1027, %v1095
        %v1128 = vadd.f32 %v1028, %v1096
        %v1129 = vadd.f32 %v1029, %v1097
        %v1130 = vadd.f32 %v1030, %v1098
        %v1131 = vadd.f32 %v1031, %v1099
        %v1132 = vadd.f32 %v1032, %v1100
        %v1133 = vadd.f32 %v1033, %v1101
        %v1134 = vadd.f32 %v1034, %v1102
        %v1135 = vadd.f32 %v1035, %v1103
        %v1136 = vadd.f32 %v1036, %v1104
        %v1137 = vadd.f32 %v1037, %v1105
        %v1138 = vadd.f32 %v1038, %v1106
        %v1139 = vadd.f32 %v1039, %v1107
        %v1140 = vadd.f32 %v1040, %v1108
        %v1141 = vadd.f32 %v1041, %v1109
        %v1142 = vadd.f32 %v1042, %v1110
        %1143 = vst [vmem:[%s209] sm:$0xff] %v1111
        %1144 = vst [vmem:[%s209 + $0x8] sm:$0xff] %v1112
        %1145 = vst [vmem:[%s209 + $0x10] sm:$0xff] %v1113
        %1146 = vst [vmem:[%s209 + $0x18] sm:$0xff] %v1114
        %1147 = vst [vmem:[%s209 + $0x20] sm:$0xff] %v1115
        %1148 = vst [vmem:[%s209 + $0x28] sm:$0xff] %v1116
        %1149 = vst [vmem:[%s209 + $0x30] sm:$0xff] %v1117
        %1150 = vst [vmem:[%s209 + $0x38] sm:$0xff] %v1118
        %1151 = vst [vmem:[%s209 + $0x40] sm:$0xff] %v1119
        %1152 = vst [vmem:[%s209 + $0x48] sm:$0xff] %v1120
        %1153 = vst [vmem:[%s209 + $0x50] sm:$0xff] %v1121
        %1154 = vst [vmem:[%s209 + $0x58] sm:$0xff] %v1122
        %1155 = vst [vmem:[%s209 + $0x60] sm:$0xff] %v1123
        %1156 = vst [vmem:[%s209 + $0x68] sm:$0xff] %v1124
        %1157 = vst [vmem:[%s209 + $0x70] sm:$0xff] %v1125
        %1158 = vst [vmem:[%s209 + $0x78] sm:$0xff] %v1126
        %1159 = vst [vmem:[%s209 + $0x80] sm:$0xff] %v1127
        %1160 = vst [vmem:[%s209 + $0x88] sm:$0xff] %v1128
        %1161 = vst [vmem:[%s209 + $0x90] sm:$0xff] %v1129
        %1162 = vst [vmem:[%s209 + $0x98] sm:$0xff] %v1130
        %1163 = vst [vmem:[%s209 + $0xa0] sm:$0xff] %v1131
        %1164 = vst [vmem:[%s209 + $0xa8] sm:$0xff] %v1132
        %1165 = vst [vmem:[%s209 + $0xb0] sm:$0xff] %v1133
        %1166 = vst [vmem:[%s209 + $0xb8] sm:$0xff] %v1134
        %1167 = vst [vmem:[%s209 + $0xc0] sm:$0xff] %v1135
        %1168 = vst [vmem:[%s209 + $0xc8] sm:$0xff] %v1136
        %1169 = vst [vmem:[%s209 + $0xd0] sm:$0xff] %v1137
        %1170 = vst [vmem:[%s209 + $0xd8] sm:$0xff] %v1138
        %1171 = vst [vmem:[%s209 + $0xe0] sm:$0xff] %v1139
        %1172 = vst [vmem:[%s209 + $0xe8] sm:$0xff] %v1140
        %1173 = vst [vmem:[%s209 + $0xf0] sm:$0xff] %v1141
        %1174 = vst [vmem:[%s209 + $0xf8] sm:$0xff] %v1142
        %s1175 = sand.u32 %s119, 1
        %s1176 = scalar_lea.sflag [#allocation3], %s1175
        %s1177 = sand.u32 %s119, 1
        %s1178 = smul.addr %s1177, 256
        %s1179 = scalar_lea.vmem [#allocation2], %s1178
        // Predicated region
        $region33: #{tpu_custom_call.1} parent=31 // pred_check
          %p1180 = pneg %p129
        $region34: #{tpu_custom_call.1} parent=31 // pred_check_branch
          %1182 = sbr.rel (%p1180) target = $region36
        $region35: #{tpu_custom_call.1} parent=31 // pred_region
          %s1184 = ssub.s32 4096, 4096
          %1185 = vsyncadd %s1176, %s1184
          %s1186 = smul.addr %s21, 32
          %s1187 = sadd.s32 %s22, %s1186
          %s1188 = smul.addr %s1187, 128
          %s1189 = scalar_lea.hbm %s3, %s1188
          %s1190 = sshll.u32 %s1179, 4
          %s1191 = int_to_ptr.vmem [resolvable:$true] %s1190
          %1196 = dma.vmem_to_hbm [thread:$0]  %s1191, 4096, %s1189, %s1176, 128, 128, 8
        $region36: #{tpu_custom_call.1} parent=31 // pred_fallthru
          _
      $region32: #{tpu_custom_call.1} parent=5 // pred_fallthru
        _
      %p1197 = scmp.le.s32.totalorder 2, %s12
      // Predicated region
      $region37: #{tpu_custom_call.1} parent=5 // pred_check
        %p1198 = pneg %p1197
      $region38: #{tpu_custom_call.1} parent=5 // pred_check_branch
        %1200 = sbr.rel (%p1198) target = $region40
      $region39: #{tpu_custom_call.1} parent=5 // pred_region
        %s1201 = ssub.s32 %s12, 2
        // Predicated region
        $region41: #{tpu_custom_call.1} parent=39 // pred_check
          %p1202 = pneg %p135
        $region42: #{tpu_custom_call.1} parent=39 // pred_check_branch
          %1204 = sbr.rel (%p1202) target = $region44
        $region43: #{tpu_custom_call.1} parent=39 // pred_region
          %s1205 = sand.u32 %s120, 1
          %s1206 = scalar_lea.sflag [#allocation3], %s1205
          %s1207 = sand.u32 %s120, 1
          %s1208 = smul.addr %s1207, 256
          %s1209 = scalar_lea.vmem [#allocation2], %s1208
          %1210 = dma.done %s1206, 4096
        $region44: #{tpu_custom_call.1} parent=39 // pred_fallthru
          _
      $region40: #{tpu_custom_call.1} parent=5 // pred_fallthru
        _
    $region6: #{tpu_custom_call.1} parent=1 // loop_footer
      %s16 = sadd.s32 1, %s12
    $region7: #{tpu_custom_call.1} parent=1 // loop_footer_branch
      %11 = sbr.rel target = $region3
    $region8: #{tpu_custom_call.1} parent=1 // loop_exit
      _
    %1211 = vsyncpa [#allocation3], 1
    %s1212 = scalar_lea.sflag [#allocation3], 1
    %1213 = vsyncpa %s1212, 1

</llo_original>
